<compile_context>
chip_gen: v6e
topology: v6e:2x2x1
jax: 0.10.0
libtpu: 0.0.40
codegen_flags: <defaults>
</compile_context>

<pallas_src>
import functools

import jax
import jax.numpy as jnp
from jax.experimental import pallas as pl
from jax.experimental.pallas import tpu as pltpu

TEMPERATURE = 1.0
EPS = 1e-7


def _round_up(x, m):
    return ((x + m - 1) // m) * m


def _kl_loss_kernel(pred_ref, label_ref, out_ref, *, n_total, batch_tile,
                    inv_temperature, needs_mask):
    """One grid step: KL partial sum over a (TB, C) batch tile.

    Writes the tile's partial sum broadcast across a lane-dense (1, 128) output
    row (one row per grid step -> no cross-step dependency -> 'parallel').
    """
    i = pl.program_id(0)

    pred = pred_ref[...].astype(jnp.float32)
    label = label_ref[...].astype(jnp.float32)

    # Temperature: compile-time constant multiply (skipped when T == 1).
    if inv_temperature != 1.0:
        pred = pred * inv_temperature
        label = label * inv_temperature

    if needs_mask:
        # Zero padded rows so exp/log stay finite; their contribution is
        # masked out of the partial sum below.
        row_ids = i * batch_tile + jax.lax.broadcasted_iota(
            jnp.int32, (batch_tile, 1), 0)
        valid = row_ids < n_total
        pred = jnp.where(valid, pred, 0.0)
        label = jnp.where(valid, label, 0.0)

    # log_softmax(pred, axis=-1), numerically stable.
    p_max = jnp.max(pred, axis=-1, keepdims=True)
    p_shift = pred - p_max
    p_lse = jnp.log(jnp.sum(jnp.exp(p_shift), axis=-1, keepdims=True))
    log_predict = p_shift - p_lse

    # softmax(label, axis=-1) + eps.  Reciprocal is per-row ((TB,1)) and kept
    # exact for parity with the reference.
    l_max = jnp.max(label, axis=-1, keepdims=True)
    l_exp = jnp.exp(label - l_max)
    l_sum = jnp.sum(l_exp, axis=-1, keepdims=True)
    target = l_exp * pl.reciprocal(l_sum, approx=False) + EPS

    elem = target * (jnp.log(target) - log_predict)
    row_sums = jnp.sum(elem, axis=-1, keepdims=True)          # (TB, 1)
    if needs_mask:
        row_sums = jnp.where(valid, row_sums, 0.0)
    partial = jnp.sum(row_sums)                                # scalar

    out_ref[...] = jnp.full((1, 128), partial, dtype=jnp.float32)


def kl_loss(pred, label, *, batch_tile=512, temperature=TEMPERATURE,
            vmem_input_budget_bytes=16 << 20):
    """KL self-distillation loss matching the PyTorch KLLoss module."""
    assert pred.shape == label.shape and pred.ndim == 2
    n, c = pred.shape
    itemsize = jnp.dtype(pred.dtype).itemsize

    # Tile rows: as large as the VMEM budget allows (2 inputs x 2 pipeline
    # buffers), clamped to the (padded) batch, multiple of 8 sublanes.
    # The budget is sized so v7x's smaller VMEM is never exceeded; v5e/v6e
    # simply get extra headroom.
    max_rows_by_vmem = max(8, vmem_input_budget_bytes // (4 * c * itemsize))
    tb = min(batch_tile, _round_up(n, 8), max_rows_by_vmem)
    tb = max(8, (tb // 8) * 8)

    num_tiles = pl.cdiv(n, tb)
    grid = (num_tiles,)
    needs_mask = (n % tb) != 0

    kernel = functools.partial(
        _kl_loss_kernel,
        n_total=n,
        batch_tile=tb,
        inv_temperature=1.0 / float(temperature),
        needs_mask=needs_mask,
    )

    in_vmem_bytes = 4 * tb * c * itemsize   # 2 inputs x 2 pipeline buffers
    vmem_limit = int(min(max(2 * in_vmem_bytes + (4 << 20), 16 << 20), 48 << 20))

    partials = pl.pallas_call(
        kernel,
        out_shape=jax.ShapeDtypeStruct((num_tiles, 128), jnp.float32),
        grid_spec=pltpu.PrefetchScalarGridSpec(
            num_scalar_prefetch=0,
            grid=grid,
            in_specs=[
                pl.BlockSpec((tb, c), lambda i: (i, 0)),
                pl.BlockSpec((tb, c), lambda i: (i, 0)),
            ],
            out_specs=pl.BlockSpec((1, 128), lambda i: (i, 0)),
        ),
        compiler_params=pltpu.CompilerParams(
            dimension_semantics=("parallel",),   # independent tiles (v7x 2-TC)
            vmem_limit_bytes=vmem_limit,
        ),
    )(pred, label)

    scale = (float(temperature) * float(temperature)) / float(n)
    return jnp.sum(partials[:, 0]) * scale


def _kl_loss_ref(pred, label, temperature=TEMPERATURE):
    """Pure-JAX reference matching the PyTorch module."""
    predict = jax.nn.log_softmax(pred / temperature, axis=1)
    target = jax.nn.softmax(label / temperature, axis=1) + EPS
    n = pred.shape[0]
    return temperature * temperature * (
        jnp.sum(jnp.sum(target * (jnp.log(target) - predict), axis=1)) / n
    )


if __name__ == "__main__":
    key = jax.random.PRNGKey(0)
    k1, k2, k3, k4 = jax.random.split(key, 4)

    # Case 1: small tile-friendly logits (batch, num_classes).
    N1, C1 = 16, 128
    pred1 = jax.random.normal(k1, (N1, C1), dtype=jnp.float32)
    label1 = jax.random.normal(k2, (N1, C1), dtype=jnp.float32)
    loss1 = kl_loss(pred1, label1)
    jax.block_until_ready(loss1)
    ref1 = _kl_loss_ref(pred1, label1)
    assert jnp.allclose(loss1, ref1, rtol=1e-5, atol=1e-5), (loss1, ref1)

    # Case 2: ragged batch (N not divisible by the tile) exercises the row
    # mask and the multi-tile 'parallel' partial-sum path.
    N2, C2 = 20, 256
    pred2 = jax.random.normal(k3, (N2, C2), dtype=jnp.float32)
    label2 = jax.random.normal(k4, (N2, C2), dtype=jnp.float32)
    loss2 = kl_loss(pred2, label2, batch_tile=8)
    jax.block_until_ready(loss2)
    ref2 = _kl_loss_ref(pred2, label2)
    assert jnp.allclose(loss2, ref2, rtol=1e-5, atol=1e-5), (loss2, ref2)

    print("KERNEL_OK")
</pallas_src>

<mosaic_0001>
module attributes {stable_mosaic.version = 11 : i64} {
  func.func @_kl_loss_kernel(%arg0: i32, %arg1: memref<16x128xf32, #tpu.memory_space<vmem>>, %arg2: memref<16x128xf32, #tpu.memory_space<vmem>>, %arg3: memref<1x128xf32, #tpu.memory_space<vmem>>) attributes {dimension_semantics = [#tpu.dimension_semantics<parallel>], iteration_bounds = array<i64: 1>, scalar_prefetch = 0 : i64, scratch_operands = 0 : i64, tpu.core_type = #tpu.core_type<tc>, window_params = [{transform_indices = @transform_0, window_bounds = array<i64: 16, 128>}, {transform_indices = @transform_1, window_bounds = array<i64: 16, 128>}, {transform_indices = @transform_2, window_bounds = array<i64: 1, 128>}]} {
    %c0 = arith.constant 0 : index
    %c0_0 = arith.constant 0 : index
    %0 = vector.load %arg1[%c0, %c0_0] : memref<16x128xf32, #tpu.memory_space<vmem>>, vector<16x128xf32>
    %c0_1 = arith.constant 0 : index
    %c0_2 = arith.constant 0 : index
    %1 = vector.load %arg2[%c0_1, %c0_2] : memref<16x128xf32, #tpu.memory_space<vmem>>, vector<16x128xf32>
    %cst = arith.constant dense<0xFF800000> : vector<16xf32>
    %2 = vector.multi_reduction <maximumf>, %0, %cst [1] : vector<16x128xf32> to vector<16xf32>
    %3 = vector.shape_cast %2 : vector<16xf32> to vector<16x1xf32>
    %4 = vector.broadcast %3 : vector<16x1xf32> to vector<16x128xf32>
    %5 = arith.subf %0, %4 : vector<16x128xf32>
    %6 = math.exp %5 : vector<16x128xf32>
    %cst_3 = arith.constant dense<0.000000e+00> : vector<16xf32>
    %7 = vector.multi_reduction <add>, %6, %cst_3 [1] : vector<16x128xf32> to vector<16xf32>
    %8 = vector.shape_cast %7 : vector<16xf32> to vector<16x1xf32>
    %9 = math.log %8 : vector<16x1xf32>
    %10 = vector.broadcast %9 : vector<16x1xf32> to vector<16x128xf32>
    %11 = arith.subf %5, %10 : vector<16x128xf32>
    %cst_4 = arith.constant dense<0xFF800000> : vector<16xf32>
    %12 = vector.multi_reduction <maximumf>, %1, %cst_4 [1] : vector<16x128xf32> to vector<16xf32>
    %13 = vector.shape_cast %12 : vector<16xf32> to vector<16x1xf32>
    %14 = vector.broadcast %13 : vector<16x1xf32> to vector<16x128xf32>
    %15 = arith.subf %1, %14 : vector<16x128xf32>
    %16 = math.exp %15 : vector<16x128xf32>
    %cst_5 = arith.constant dense<0.000000e+00> : vector<16xf32>
    %17 = vector.multi_reduction <add>, %16, %cst_5 [1] : vector<16x128xf32> to vector<16xf32>
    %18 = vector.shape_cast %17 : vector<16xf32> to vector<16x1xf32>
    %19 = tpu.reciprocal %18 : vector<16x1xf32> -> vector<16x1xf32>
    %20 = vector.broadcast %19 : vector<16x1xf32> to vector<16x128xf32>
    %21 = arith.mulf %16, %20 : vector<16x128xf32>
    %cst_6 = arith.constant 1.000000e-07 : f32
    %22 = vector.broadcast %cst_6 : f32 to vector<16x128xf32>
    %23 = arith.addf %21, %22 : vector<16x128xf32>
    %24 = math.log %23 : vector<16x128xf32>
    %25 = arith.subf %24, %11 : vector<16x128xf32>
    %26 = arith.mulf %23, %25 : vector<16x128xf32>
    %cst_7 = arith.constant dense<0.000000e+00> : vector<16xf32>
    %27 = vector.multi_reduction <add>, %26, %cst_7 [1] : vector<16x128xf32> to vector<16xf32>
    %28 = vector.shape_cast %27 : vector<16xf32> to vector<16x1xf32>
    %29 = vector.shape_cast %28 : vector<16x1xf32> to vector<1x16x1xf32>
    %cst_8 = arith.constant dense<0.000000e+00> : vector<1xf32>
    %30 = vector.multi_reduction <add>, %29, %cst_8 [1, 2] : vector<1x16x1xf32> to vector<1xf32>
    %31 = vector.shape_cast %30 : vector<1xf32> to vector<1x1x1xf32>
    %32 = vector.extract %31[0, 0, 0] : f32 from vector<1x1x1xf32>
    %33 = vector.broadcast %32 : f32 to vector<1x128xf32>
    %c0_9 = arith.constant 0 : index
    %c0_10 = arith.constant 0 : index
    %34 = vector.load %arg3[%c0_9, %c0_10] : memref<1x128xf32, #tpu.memory_space<vmem>>, vector<1x128xf32>
    tpu.vector_store %arg3[%c0_9, %c0_10], %33 {strides = array<i32>} : memref<1x128xf32, #tpu.memory_space<vmem>>, vector<1x128xf32>,
    return
  }
  func.func @transform_0(%arg0: i32) -> (i32, i32) {
    %c0_i32 = arith.constant 0 : i32
    %c0_i32_0 = arith.constant 0 : i32
    return %arg0, %c0_i32 : i32, i32
  }
  func.func @transform_1(%arg0: i32) -> (i32, i32) {
    %c0_i32 = arith.constant 0 : i32
    %c0_i32_0 = arith.constant 0 : i32
    return %arg0, %c0_i32 : i32, i32
  }
  func.func @transform_2(%arg0: i32) -> (i32, i32) {
    %c0_i32 = arith.constant 0 : i32
    %c0_i32_0 = arith.constant 0 : i32
    return %arg0, %c0_i32 : i32, i32
  }
}

</mosaic_0001>

<llo_original>
// kernel: tpu_custom_call.1
$region0: #{tpu_custom_call.1}
  #allocation0 [shape = 'u32[]', space=smem, size = 0x4, offset = 0x4, fixed_abs, tag = 'smem constant byte address 0x4 - core index']
  #allocation1 [shape = 'u32[144,128]{1,0:T(1,128)}', space=vmem, size = 0x12000, scoped, tag = 'internal scratch']
  %s0 = inlined_call_operand.hbm [shape: f32[16,128], index: 0, kind: input, shape index: {}]
  %s1 = inlined_call_operand.hbm [shape: f32[16,128], index: 1, kind: input, shape index: {}]
  %s2 = inlined_call_operand.hbm [shape: f32[1,128], index: 2, kind: output, shape index: {}]
  %s3 = sld [smem:[#allocation0]]
  $region26: #{tpu_custom_call.1} parent=0
    _
  %s5 = ssub.s32 1, %s3
  %s6 = scalar_select 0, %s5, %s3
  $region1: #{tpu_custom_call.1} parent=0
    #allocation2 [shape = 'u8[8192]{0}', space=vmem, size = 0x2000, scoped, tag = 'input window, operand 0, single buffered']
    #allocation3 [shape = 's32[1]{0}', space=sflag, size = 0x4, scoped, tag = 'scoped memory for tpu_custom_call.1']
    #allocation4 [shape = 's32[1]{0}', space=sflag, size = 0x4, scoped, tag = 'scoped memory for tpu_custom_call.1']
    #allocation5 [shape = 'u8[8192]{0}', space=vmem, size = 0x2000, scoped, tag = 'input window, operand 1, single buffered']
    #allocation6 [shape = 's32[1]{0}', space=sflag, size = 0x4, scoped, tag = 'scoped memory for tpu_custom_call.1']
    #allocation7 [shape = 'u8[512]{0}', space=vmem, size = 0x400, scoped, tag = 'output window, operand 0, single buffered']
    %7 = vsyncpa [#allocation3], 0
    %8 = vsyncpa [#allocation6], 0
    %9 = vsyncpa [#allocation4], 0
    // Predicated region
    $region2: #{tpu_custom_call.1} parent=1 // pred_check
      _
    $region3: #{tpu_custom_call.1} parent=1 // pred_check_branch
      %11 = sbr.rel (0) target = $region5
    $region4: #{tpu_custom_call.1} parent=1 // pred_region
      %s13 = ssub.s32 256, 256
      %14 = vsyncadd [#allocation3], %s13
      %s15 = sshll.u32 [#allocation2], 4
      %s16 = int_to_ptr.vmem [resolvable:$true] %s15
      %21 = dma.hbm_to_vmem [thread:$0]  %s0, 256, %s16, [#allocation3], 128, 128, 8
    $region5: #{tpu_custom_call.1} parent=1 // pred_fallthru
      _
    // Predicated region
    $region6: #{tpu_custom_call.1} parent=1 // pred_check
      _
    $region7: #{tpu_custom_call.1} parent=1 // pred_check_branch
      %23 = sbr.rel (0) target = $region9
    $region8: #{tpu_custom_call.1} parent=1 // pred_region
      %s25 = ssub.s32 256, 256
      %26 = vsyncadd [#allocation6], %s25
      %s27 = sshll.u32 [#allocation5], 4
      %s28 = int_to_ptr.vmem [resolvable:$true] %s27
      %33 = dma.hbm_to_vmem [thread:$0]  %s1, 256, %s28, [#allocation6], 128, 128, 8
    $region9: #{tpu_custom_call.1} parent=1 // pred_fallthru
      _
    // Predicated region
    $region10: #{tpu_custom_call.1} parent=1 // pred_check
      _
    $region11: #{tpu_custom_call.1} parent=1 // pred_check_branch
      %35 = sbr.rel (0) target = $region13
    $region12: #{tpu_custom_call.1} parent=1 // pred_region
      %36 = dma.done [#allocation3], 256
    $region13: #{tpu_custom_call.1} parent=1 // pred_fallthru
      _
    // Predicated region
    $region14: #{tpu_custom_call.1} parent=1 // pred_check
      _
    $region15: #{tpu_custom_call.1} parent=1 // pred_check_branch
      %38 = sbr.rel (0) target = $region17
    $region16: #{tpu_custom_call.1} parent=1 // pred_region
      %39 = dma.done [#allocation6], 256
    $region17: #{tpu_custom_call.1} parent=1 // pred_fallthru
      _
    %v40 = vld [vmem:[#allocation2] sm:$0xff]
    %v41 = vld [vmem:[#allocation2 + $0x8] sm:$0xff]
    %v42 = vld [vmem:[#allocation5] sm:$0xff]
    %v43 = vld [vmem:[#allocation5 + $0x8] sm:$0xff]
    %44 = vmax.xlane.f32.xlu0 %v40
    %v45 = vpop.xlane.xlu0 %44
    %46 = vmax.xlane.f32.xlu0 %v41
    %v47 = vpop.xlane.xlu0 %46
    %v48 = vsub.f32 %v40, %v45
    %v49 = vsub.f32 %v41, %v47
    %v50 = vmul.f32 %v48, 1.442695
    %v51 = vpow.pop %v50
    %v52 = vmul.f32 %v49, 1.442695
    %v53 = vpow.pop %v52
    %54 = vadd.xlane.f32.xlu0 %v51
    %v55 = vpop.xlane.xlu0 %54
    %56 = vadd.xlane.f32.xlu0 %v53
    %v57 = vpop.xlane.xlu0 %56
    %v58 = vlog2.pop %v55
    %v59 = vmul.f32 %v58, 0.6931472
    %v60 = vlog2.pop %v57
    %v61 = vmul.f32 %v60, 0.6931472
    %v62 = vsub.f32 %v48, %v59
    %v63 = vsub.f32 %v49, %v61
    %64 = vmax.xlane.f32.xlu0 %v42
    %v65 = vpop.xlane.xlu0 %64
    %66 = vmax.xlane.f32.xlu0 %v43
    %v67 = vpop.xlane.xlu0 %66
    %v68 = vsub.f32 %v42, %v65
    %v69 = vsub.f32 %v43, %v67
    %v70 = vmul.f32 %v68, 1.442695
    %v71 = vpow.pop %v70
    %v72 = vmul.f32 %v69, 1.442695
    %v73 = vpow.pop %v72
    %74 = vadd.xlane.f32.xlu0 %v71
    %v75 = vpop.xlane.xlu0 %74
    %76 = vadd.xlane.f32.xlu0 %v73
    %v77 = vpop.xlane.xlu0 %76
    %v78 = vrcp.pop %v75
    %v79 = vrcp.pop %v77
    %v80 = vmul.f32 %v71, %v78
    %v81 = vmul.f32 %v73, %v79
    %v82 = vadd.f32 %v80, 1e-07
    %v83 = vadd.f32 %v81, 1e-07
    %v84 = vlog2.pop %v82
    %v85 = vmul.f32 %v84, 0.6931472
    %v86 = vlog2.pop %v83
    %v87 = vmul.f32 %v86, 0.6931472
    %v88 = vsub.f32 %v85, %v62
    %v89 = vsub.f32 %v87, %v63
    %v90 = vmul.f32 %v82, %v88
    %v91 = vmul.f32 %v83, %v89
    %92 = vadd.xlane.f32.xlu0 %v90
    %v93 = vpop.xlane.xlu0 %92
    %94 = vadd.xlane.f32.xlu0 %v91
    %v95 = vpop.xlane.xlu0 %94
    %vm96 = vcmask 7168
    %v97 = vsel %vm96, %v93, 0.0
    %v98 = vsel %vm96, %v95, 0.0
    %v99 = vadd.f32 %v97, %v98
    %100 = vadd.xlane.f32.xlu0 %v99
    %v101 = vpop.xlane.xlu0 %100
    %v102 = vrot.slane %v101, 4
    %v103 = vadd.f32 %v101, %v102
    %v104 = vrot.slane %v103, 2
    %v105 = vadd.f32 %v103, %v104
    %v106 = vrot.slane %v105, 1
    %v107 = vadd.f32 %v105, %v106
    %s108 = vtos %v107
    %v109 = vstv %s108
    %110 = vst [vmem:[#allocation7] sm:$0x1] %v109
    // Predicated region
    $region18: #{tpu_custom_call.1} parent=1 // pred_check
      _
    $region19: #{tpu_custom_call.1} parent=1 // pred_check_branch
      %112 = sbr.rel (0) target = $region21
    $region20: #{tpu_custom_call.1} parent=1 // pred_region
      %s114 = ssub.s32 16, 16
      %115 = vsyncadd [#allocation4], %s114
      %s117 = sshll.u32 [#allocation7], 4
      %s118 = int_to_ptr.vmem [resolvable:$true] %s117
      %120 = dma.vmem_to_hbm [thread:$0]  %s118, 16, %s2, [#allocation4]
    $region21: #{tpu_custom_call.1} parent=1 // pred_fallthru
      _
    // Predicated region
    $region22: #{tpu_custom_call.1} parent=1 // pred_check
      _
    $region23: #{tpu_custom_call.1} parent=1 // pred_check_branch
      %122 = sbr.rel (0) target = $region25
    $region24: #{tpu_custom_call.1} parent=1 // pred_region
      %123 = dma.done [#allocation4], 16
    $region25: #{tpu_custom_call.1} parent=1 // pred_fallthru
      _
    %124 = vsyncpa [#allocation3], 1
    %125 = vsyncpa [#allocation6], 1
    %126 = vsyncpa [#allocation4], 1

</llo_original>
